<compile_context>
chip_gen: v7x
topology: tpu7x:2x2x1
jax: 0.10.0
libtpu: 0.0.40
codegen_flags: <defaults>
</compile_context>

<pallas_src>
import functools
import math

import jax
import jax.numpy as jnp
from jax.experimental import pallas as pl
from jax.experimental.pallas import tpu as pltpu


# ----------------------------------------------------------------------------
# helpers
# ----------------------------------------------------------------------------
def _ln(x, eps):
    """LayerNorm statistics over the last axis (no affine)."""
    mu = jnp.mean(x, axis=-1, keepdims=True)
    var = jnp.mean((x - mu) ** 2, axis=-1, keepdims=True)
    return (x - mu) * jax.lax.rsqrt(var + eps)


# ----------------------------------------------------------------------------
# Kernel 1: input embeddings
#   src = LayerNorm_E( encoder_c(vols) + encoder_pos(sens_pos) )    on (S*B, .) rows
# ----------------------------------------------------------------------------
def _embed_kernel(sens_ref, vols_ref, wp1_ref, wp2_ref, wc1_ref, wc2_ref,
                  ln32_ref, lnE_ref, out_ref, *, eps):
    ln32 = ln32_ref[...]          # (4, n_enco): rows = [gp, bp, gc, bc]
    lnE = lnE_ref[...]            # (2, E):      rows = [gs, bs]

    # encoder_pos: Linear(no bias) -> ReLU -> LayerNorm -> Linear(no bias)
    h = jnp.dot(sens_ref[...], wp1_ref[...], preferred_element_type=jnp.float32)
    h = jnp.maximum(h, 0.0)
    h = _ln(h, eps) * ln32[0:1, :] + ln32[1:2, :]
    e_pos = jnp.dot(h, wp2_ref[...], preferred_element_type=jnp.float32)     # (M, E)

    # encoder_c: Linear(1 -> n_enco, no bias) is just a broadcast multiply (K = 1)
    c = vols_ref[...] * wc1_ref[...]                                          # (M, n_enco)
    c = jnp.maximum(c, 0.0)
    c = _ln(c, eps) * ln32[2:3, :] + ln32[3:4, :]
    c = jnp.dot(c, wc2_ref[...], preferred_element_type=jnp.float32)          # (M, E)

    # encoder_src: LayerNorm(E)
    src = _ln(c + e_pos, eps) * lnE[0:1, :] + lnE[1:2, :]
    out_ref[...] = src.astype(out_ref.dtype)


# ----------------------------------------------------------------------------
# Kernel 2: the whole TransformerEncoder stack (post-norm layers, ReLU, eval mode)
#   grid = (n_layers,), "arbitrary"; activations carried in the output block.
# ----------------------------------------------------------------------------
def _encoder_stack_kernel(src_ref, bias_ref, wqkv_ref, bqkv_ref, wo_ref, pvec_ref,
                          w1_ref, b1_ref, w2_ref, out_ref, *, eps):
    layer = pl.program_id(0)

    @pl.when(layer == 0)
    def _():
        out_ref[...] = src_ref[...]

    x = out_ref[...].astype(jnp.float32)        # (M, E): carried layer-to-layer in VMEM
    M, E = x.shape

    wqkv = wqkv_ref[0]                          # (H, E, 3d)  per-head fused q|k|v weights
    bqkv = bqkv_ref[0]                          # (H, 1, 3d)
    wo_h = wo_ref[0]                            # (H, d, E)
    pvec = pvec_ref[0]                          # (6, E): [bo, b2, g1, be1, g2, be2]
    w1 = w1_ref[0]                              # (E, F)
    b1 = b1_ref[0]                              # (1, F)
    w2 = w2_ref[0]                              # (F, E)

    H = wqkv.shape[0]
    d = wqkv.shape[-1] // 3
    scale = 1.0 / math.sqrt(d)

    bo, b2 = pvec[0:1, :], pvec[1:2, :]
    g1, be1 = pvec[2:3, :], pvec[3:4, :]
    g2, be2 = pvec[4:5, :], pvec[5:6, :]

    # ---- fused QKV projection: one batched MXU op with heads as the batch dim ----
    xb = jnp.broadcast_to(x[None, :, :], (H, M, E))
    qkv = jnp.einsum("hme,hef->hmf", xb, wqkv,
                     preferred_element_type=jnp.float32) + bqkv               # (H, M, 3d)
    q = qkv[:, :, 0:d] * scale
    k = qkv[:, :, d:2 * d]
    v = qkv[:, :, 2 * d:3 * d]

    # ---- scores + softmax; cross-batch pairs disabled by the additive bias mask ----
    s = jnp.einsum("hmd,hnd->hmn", q, k, preferred_element_type=jnp.float32)  # (H, M, M)
    s = s + bias_ref[...]
    s = s - jnp.max(s, axis=-1, keepdims=True)
    p = jnp.exp(s)
    p = p * pl.reciprocal(jnp.sum(p, axis=-1, keepdims=True), approx=True)
    o = jnp.einsum("hmn,hnd->hmd", p, v, preferred_element_type=jnp.float32)  # (H, M, d)

    # ---- output projection; head-concat folded into per-head (d, E) matmuls ----
    attn = jnp.sum(jnp.einsum("hmd,hde->hme", o, wo_h,
                              preferred_element_type=jnp.float32), axis=0) + bo

    # TODO(synk): dropout / dropout1 / dropout2 are identity in eval mode (no RNG here).

    # ---- residual + LayerNorm1 ----
    y = _ln(x + attn, eps) * g1 + be1

    # ---- feed-forward: Linear -> ReLU -> Linear ----
    h1 = jnp.maximum(jnp.dot(y, w1, preferred_element_type=jnp.float32) + b1, 0.0)
    h2 = jnp.dot(h1, w2, preferred_element_type=jnp.float32) + b2

    # ---- residual + LayerNorm2 ----
    z = _ln(y + h2, eps) * g2 + be2
    out_ref[...] = z.astype(out_ref.dtype)


# ----------------------------------------------------------------------------
# wrapper
# ----------------------------------------------------------------------------
def encoder_forward(sens_pos, vols, params, *, n_head, eps=1e-5):
    """Encoder.forward in Pallas.  sens_pos: (S, 1, 2*n_point), vols: (S, B, 1)."""
    S, _, P2 = sens_pos.shape
    B = vols.shape[1]
    M = S * B
    E = params["wp2"].shape[1]
    F = params["layers"][0]["w1"].shape[1]
    L = len(params["layers"])
    H = n_head
    d = E // H
    f32 = jnp.float32

    # -------- stage 1: embeddings (single grid-less call over the (S*B, .) fold) -----
    kp = 8  # pad the tiny (2*n_point) contraction dim up to a sublane multiple
    sens_exp = jnp.broadcast_to(sens_pos.astype(f32), (S, B, P2)).reshape(M, P2)
    sens_exp = jnp.pad(sens_exp, ((0, 0), (0, kp - P2)))
    wp1_p = jnp.pad(params["wp1"].astype(f32), ((0, kp - P2), (0, 0)))
    vols2d = vols.astype(f32).reshape(M, 1)
    ln32 = jnp.stack([params["gp"], params["bp"], params["gc"], params["bc"]]).astype(f32)
    lnE = jnp.stack([params["gs"], params["bs"]]).astype(f32)

    src2d = pl.pallas_call(
        functools.partial(_embed_kernel, eps=eps),
        out_shape=jax.ShapeDtypeStruct((M, E), f32),
    )(sens_exp, vols2d, wp1_p, params["wp2"].astype(f32),
      params["wc1"].astype(f32), params["wc2"].astype(f32), ln32, lnE)

    # -------- stage 2: transformer encoder stack (one call, grid over layers) --------
    def _pack_layer(lp):
        cols = lambda w: jnp.stack([w[:, h * d:(h + 1) * d] for h in range(H)], 0)
        vec = lambda b: jnp.stack([b[h * d:(h + 1) * d] for h in range(H)], 0)[:, None, :]
        wqkv = jnp.concatenate([cols(lp["wq"]), cols(lp["wk"]), cols(lp["wv"])], -1)
        bqkv = jnp.concatenate([vec(lp["bq"]), vec(lp["bk"]), vec(lp["bv"])], -1)
        wo_h = jnp.stack([lp["wo"][h * d:(h + 1) * d, :] for h in range(H)], 0)
        pvec = jnp.stack([lp["bo"], lp["b2"], lp["g1"], lp["be1"], lp["g2"], lp["be2"]], 0)
        return (wqkv, bqkv, wo_h, pvec, lp["w1"], lp["b1"][None, :], lp["w2"])

    packed = [_pack_layer(lp) for lp in params["layers"]]
    stacked = [jnp.stack([p[i] for p in packed]).astype(f32) for i in range(7)]
    wqkv_s, bqkv_s, wo_s, pvec_s, w1_s, b1_s, w2_s = stacked

    # additive mask: rows of the seq-first fold (row m <-> batch m % B) may only attend
    # rows of the same batch element.
    row_b = jnp.arange(M, dtype=jnp.int32) % B
    attn_bias = jnp.where(row_b[:, None] == row_b[None, :], 0.0, -1e30).astype(f32)

    out2d = pl.pallas_call(
        functools.partial(_encoder_stack_kernel, eps=eps),
        out_shape=jax.ShapeDtypeStruct((M, E), f32),
        grid=(L,),
        in_specs=[
            pl.BlockSpec((M, E), lambda l: (0, 0)),                   # src (layer 0 only)
            pl.BlockSpec((M, M), lambda l: (0, 0)),                   # attention bias
            pl.BlockSpec((1, H, E, 3 * d), lambda l: (l, 0, 0, 0)),   # per-head qkv W
            pl.BlockSpec((1, H, 1, 3 * d), lambda l: (l, 0, 0, 0)),   # per-head qkv b
            pl.BlockSpec((1, H, d, E), lambda l: (l, 0, 0, 0)),       # per-head out W
            pl.BlockSpec((1, 6, E), lambda l: (l, 0, 0)),             # bo|b2|g1|be1|g2|be2
            pl.BlockSpec((1, E, F), lambda l: (l, 0, 0)),             # linear1 W
            pl.BlockSpec((1, 1, F), lambda l: (l, 0, 0)),             # linear1 b
            pl.BlockSpec((1, F, E), lambda l: (l, 0, 0)),             # linear2 W
        ],
        out_specs=pl.BlockSpec((M, E), lambda l: (0, 0)),
        compiler_params=pltpu.CompilerParams(
            dimension_semantics=("arbitrary",)),  # sequential layer-to-layer carry
    )(src2d, attn_bias, wqkv_s, bqkv_s, wo_s, pvec_s, w1_s, b1_s, w2_s)

    return out2d.reshape(S, B, E)


# ----------------------------------------------------------------------------
# pure-JAX reference (mirrors PyTorch Encoder semantics, eval mode)
# ----------------------------------------------------------------------------
def _ref_forward(sens_pos, vols, params, n_head, eps=1e-5):
    S = sens_pos.shape[0]
    B = vols.shape[1]
    E = params["wp2"].shape[1]
    H = n_head
    d = E // H

    def ln(x, g, b):
        mu = jnp.mean(x, -1, keepdims=True)
        var = jnp.mean((x - mu) ** 2, -1, keepdims=True)
        return (x - mu) * jax.lax.rsqrt(var + eps) * g + b

    h = jnp.maximum(sens_pos @ params["wp1"], 0.0)
    h = ln(h, params["gp"], params["bp"])
    e_pos = jnp.broadcast_to(h @ params["wp2"], (S, B, E))
    c = jnp.maximum(vols @ params["wc1"], 0.0)
    c = ln(c, params["gc"], params["bc"])
    c = c @ params["wc2"]
    x = ln(c + e_pos, params["gs"], params["bs"])               # (S, B, E)

    scale = 1.0 / math.sqrt(d)
    for lp in params["layers"]:
        q = (x @ lp["wq"] + lp["bq"]).reshape(S, B, H, d) * scale
        k = (x @ lp["wk"] + lp["bk"]).reshape(S, B, H, d)
        v = (x @ lp["wv"] + lp["bv"]).reshape(S, B, H, d)
        s = jnp.einsum("sbhd,tbhd->bhst", q, k)
        p = jax.nn.softmax(s, axis=-1)
        a = jnp.einsum("bhst,tbhd->sbhd", p, v).reshape(S, B, E)
        a = a @ lp["wo"] + lp["bo"]
        x = ln(x + a, lp["g1"], lp["be1"])
        hh = jnp.maximum(x @ lp["w1"] + lp["b1"], 0.0) @ lp["w2"] + lp["b2"]
        x = ln(x + hh, lp["g2"], lp["be2"])
    return x


# ----------------------------------------------------------------------------
# parameter construction
# ----------------------------------------------------------------------------
def _init_params(key, *, n_point, n_enco, n_embed, n_hid, n_layers):
    p2 = 2 * n_point
    keys = iter(jax.random.split(key, 8 + 16 * n_layers))

    def xavier(shape):
        lim = math.sqrt(6.0 / (shape[0] + shape[-1]))
        return jax.random.uniform(next(keys), shape, jnp.float32, -lim, lim)

    def small(shape):
        return 0.02 * jax.random.normal(next(keys), shape, jnp.float32)

    params = {
        "wp1": xavier((p2, n_enco)),
        "gp": jnp.ones((n_enco,), jnp.float32), "bp": jnp.zeros((n_enco,), jnp.float32),
        "wp2": xavier((n_enco, n_embed)),
        "wc1": xavier((1, n_enco)),
        "gc": jnp.ones((n_enco,), jnp.float32), "bc": jnp.zeros((n_enco,), jnp.float32),
        "wc2": xavier((n_enco, n_embed)),
        "gs": jnp.ones((n_embed,), jnp.float32), "bs": jnp.zeros((n_embed,), jnp.float32),
        "layers": [],
    }
    for _ in range(n_layers):
        params["layers"].append({
            "wq": xavier((n_embed, n_embed)), "wk": xavier((n_embed, n_embed)),
            "wv": xavier((n_embed, n_embed)),
            "bq": small((n_embed,)), "bk": small((n_embed,)), "bv": small((n_embed,)),
            "wo": xavier((n_embed, n_embed)), "bo": small((n_embed,)),
            "w1": xavier((n_embed, n_hid)), "b1": small((n_hid,)),
            "w2": xavier((n_hid, n_embed)), "b2": small((n_embed,)),
            "g1": jnp.ones((n_embed,), jnp.float32), "be1": jnp.zeros((n_embed,), jnp.float32),
            "g2": jnp.ones((n_embed,), jnp.float32), "be2": jnp.zeros((n_embed,), jnp.float32),
        })
    return params


if __name__ == "__main__":
    # small config consistent with the module (defaults: n_embed=128, n_head=4, n_enco=32)
    n_point, n_enco = 3, 32
    n_embed, n_hid, n_head, n_elayers = 128, 256, 4, 2
    S, B = 8, 2

    key = jax.random.PRNGKey(0)
    k_s, k_v, k_p = jax.random.split(key, 3)
    sens_pos = jax.random.normal(k_s, (S, 1, 2 * n_point), jnp.float32)
    vols = jax.random.normal(k_v, (S, B, 1), jnp.float32)
    params = _init_params(k_p, n_point=n_point, n_enco=n_enco, n_embed=n_embed,
                          n_hid=n_hid, n_layers=n_elayers)

    out = encoder_forward(sens_pos, vols, params, n_head=n_head)
    out = jax.block_until_ready(out)

    ref = _ref_forward(sens_pos, vols, params, n_head)
    assert out.shape == (S, B, n_embed)
    # approx EUP reciprocal in the softmax => slightly looser tolerance than exact f32
    assert jnp.allclose(out, ref, atol=5e-3, rtol=5e-3), "mismatch vs reference"
    print("KERNEL_OK")
</pallas_src>

<mosaic_0001>
module attributes {stable_mosaic.version = 11 : i64} {
  func.func @_embed_kernel(%arg0: memref<16x8xf32, #tpu.memory_space<vmem>>, %arg1: memref<16x1xf32, #tpu.memory_space<vmem>>, %arg2: memref<8x32xf32, #tpu.memory_space<vmem>>, %arg3: memref<32x128xf32, #tpu.memory_space<vmem>>, %arg4: memref<1x32xf32, #tpu.memory_space<vmem>>, %arg5: memref<32x128xf32, #tpu.memory_space<vmem>>, %arg6: memref<4x32xf32, #tpu.memory_space<vmem>>, %arg7: memref<2x128xf32, #tpu.memory_space<vmem>>, %arg8: memref<16x128xf32, #tpu.memory_space<vmem>>) attributes {dimension_semantics = [], scalar_prefetch = 0 : i64, scratch_operands = 0 : i64, tpu.core_type = #tpu.core_type<tc>} {
    %c0 = arith.constant 0 : index
    %c0_0 = arith.constant 0 : index
    %0 = vector.load %arg6[%c0, %c0_0] : memref<4x32xf32, #tpu.memory_space<vmem>>, vector<4x32xf32>
    %c0_1 = arith.constant 0 : index
    %c0_2 = arith.constant 0 : index
    %1 = vector.load %arg7[%c0_1, %c0_2] : memref<2x128xf32, #tpu.memory_space<vmem>>, vector<2x128xf32>
    %c0_3 = arith.constant 0 : index
    %c0_4 = arith.constant 0 : index
    %2 = vector.load %arg0[%c0_3, %c0_4] : memref<16x8xf32, #tpu.memory_space<vmem>>, vector<16x8xf32>
    %c0_5 = arith.constant 0 : index
    %c0_6 = arith.constant 0 : index
    %3 = vector.load %arg2[%c0_5, %c0_6] : memref<8x32xf32, #tpu.memory_space<vmem>>, vector<8x32xf32>
    %cst = arith.constant dense<0.000000e+00> : vector<16x32xf32>
    %4 = tpu.matmul %2, %3, %cst {dimension_numbers = #tpu.dot_dimension_numbers<[1], [0], [0], [1], [0, 0, 1, 1], [], []>} : vector<16x8xf32>, vector<8x32xf32>, vector<16x32xf32> -> vector<16x32xf32>
    %cst_7 = arith.constant 0.000000e+00 : f32
    %5 = vector.broadcast %cst_7 : f32 to vector<16x32xf32>
    %6 = arith.maximumf %4, %5 : vector<16x32xf32>
    %cst_8 = arith.constant dense<0.000000e+00> : vector<16xf32>
    %7 = vector.multi_reduction <add>, %6, %cst_8 [1] : vector<16x32xf32> to vector<16xf32>
    %8 = vector.shape_cast %7 : vector<16xf32> to vector<16x1xf32>
    %cst_9 = arith.constant 3.200000e+01 : f32
    %9 = vector.broadcast %cst_9 : f32 to vector<16x1xf32>
    %10 = arith.divf %8, %9 : vector<16x1xf32>
    %11 = vector.broadcast %10 : vector<16x1xf32> to vector<16x32xf32>
    %12 = arith.subf %6, %11 : vector<16x32xf32>
    %13 = arith.mulf %12, %12 : vector<16x32xf32>
    %cst_10 = arith.constant dense<0.000000e+00> : vector<16xf32>
    %14 = vector.multi_reduction <add>, %13, %cst_10 [1] : vector<16x32xf32> to vector<16xf32>
    %15 = vector.shape_cast %14 : vector<16xf32> to vector<16x1xf32>
    %cst_11 = arith.constant 3.200000e+01 : f32
    %16 = vector.broadcast %cst_11 : f32 to vector<16x1xf32>
    %17 = arith.divf %15, %16 : vector<16x1xf32>
    %18 = vector.broadcast %10 : vector<16x1xf32> to vector<16x32xf32>
    %19 = arith.subf %6, %18 : vector<16x32xf32>
    %cst_12 = arith.constant 9.99999974E-6 : f32
    %20 = vector.broadcast %cst_12 : f32 to vector<16x1xf32>
    %21 = arith.addf %17, %20 : vector<16x1xf32>
    %22 = math.rsqrt %21 : vector<16x1xf32>
    %23 = vector.broadcast %22 : vector<16x1xf32> to vector<16x32xf32>
    %24 = arith.mulf %19, %23 : vector<16x32xf32>
    %25 = vector.extract_strided_slice %0 {offsets = [0, 0], sizes = [1, 32], strides = [1, 1]} : vector<4x32xf32> to vector<1x32xf32>
    %26 = vector.broadcast %25 : vector<1x32xf32> to vector<16x32xf32>
    %27 = arith.mulf %24, %26 : vector<16x32xf32>
    %28 = vector.extract_strided_slice %0 {offsets = [1, 0], sizes = [1, 32], strides = [1, 1]} : vector<4x32xf32> to vector<1x32xf32>
    %29 = vector.broadcast %28 : vector<1x32xf32> to vector<16x32xf32>
    %30 = arith.addf %27, %29 : vector<16x32xf32>
    %c0_13 = arith.constant 0 : index
    %c0_14 = arith.constant 0 : index
    %31 = vector.load %arg3[%c0_13, %c0_14] : memref<32x128xf32, #tpu.memory_space<vmem>>, vector<32x128xf32>
    %cst_15 = arith.constant dense<0.000000e+00> : vector<16x128xf32>
    %32 = tpu.matmul %30, %31, %cst_15 {dimension_numbers = #tpu.dot_dimension_numbers<[1], [0], [0], [1], [0, 0, 1, 1], [], []>} : vector<16x32xf32>, vector<32x128xf32>, vector<16x128xf32> -> vector<16x128xf32>
    %c0_16 = arith.constant 0 : index
    %c0_17 = arith.constant 0 : index
    %33 = vector.load %arg1[%c0_16, %c0_17] : memref<16x1xf32, #tpu.memory_space<vmem>>, vector<16x1xf32>
    %c0_18 = arith.constant 0 : index
    %c0_19 = arith.constant 0 : index
    %34 = vector.load %arg4[%c0_18, %c0_19] : memref<1x32xf32, #tpu.memory_space<vmem>>, vector<1x32xf32>
    %35 = vector.broadcast %33 : vector<16x1xf32> to vector<16x32xf32>
    %36 = vector.broadcast %34 : vector<1x32xf32> to vector<16x32xf32>
    %37 = arith.mulf %35, %36 : vector<16x32xf32>
    %cst_20 = arith.constant 0.000000e+00 : f32
    %38 = vector.broadcast %cst_20 : f32 to vector<16x32xf32>
    %39 = arith.maximumf %37, %38 : vector<16x32xf32>
    %cst_21 = arith.constant dense<0.000000e+00> : vector<16xf32>
    %40 = vector.multi_reduction <add>, %39, %cst_21 [1] : vector<16x32xf32> to vector<16xf32>
    %41 = vector.shape_cast %40 : vector<16xf32> to vector<16x1xf32>
    %cst_22 = arith.constant 3.200000e+01 : f32
    %42 = vector.broadcast %cst_22 : f32 to vector<16x1xf32>
    %43 = arith.divf %41, %42 : vector<16x1xf32>
    %44 = vector.broadcast %43 : vector<16x1xf32> to vector<16x32xf32>
    %45 = arith.subf %39, %44 : vector<16x32xf32>
    %46 = arith.mulf %45, %45 : vector<16x32xf32>
    %cst_23 = arith.constant dense<0.000000e+00> : vector<16xf32>
    %47 = vector.multi_reduction <add>, %46, %cst_23 [1] : vector<16x32xf32> to vector<16xf32>
    %48 = vector.shape_cast %47 : vector<16xf32> to vector<16x1xf32>
    %cst_24 = arith.constant 3.200000e+01 : f32
    %49 = vector.broadcast %cst_24 : f32 to vector<16x1xf32>
    %50 = arith.divf %48, %49 : vector<16x1xf32>
    %51 = vector.broadcast %43 : vector<16x1xf32> to vector<16x32xf32>
    %52 = arith.subf %39, %51 : vector<16x32xf32>
    %cst_25 = arith.constant 9.99999974E-6 : f32
    %53 = vector.broadcast %cst_25 : f32 to vector<16x1xf32>
    %54 = arith.addf %50, %53 : vector<16x1xf32>
    %55 = math.rsqrt %54 : vector<16x1xf32>
    %56 = vector.broadcast %55 : vector<16x1xf32> to vector<16x32xf32>
    %57 = arith.mulf %52, %56 : vector<16x32xf32>
    %58 = vector.extract_strided_slice %0 {offsets = [2, 0], sizes = [1, 32], strides = [1, 1]} : vector<4x32xf32> to vector<1x32xf32>
    %59 = vector.broadcast %58 : vector<1x32xf32> to vector<16x32xf32>
    %60 = arith.mulf %57, %59 : vector<16x32xf32>
    %61 = vector.extract_strided_slice %0 {offsets = [3, 0], sizes = [1, 32], strides = [1, 1]} : vector<4x32xf32> to vector<1x32xf32>
    %62 = vector.broadcast %61 : vector<1x32xf32> to vector<16x32xf32>
    %63 = arith.addf %60, %62 : vector<16x32xf32>
    %c0_26 = arith.constant 0 : index
    %c0_27 = arith.constant 0 : index
    %64 = vector.load %arg5[%c0_26, %c0_27] : memref<32x128xf32, #tpu.memory_space<vmem>>, vector<32x128xf32>
    %cst_28 = arith.constant dense<0.000000e+00> : vector<16x128xf32>
    %65 = tpu.matmul %63, %64, %cst_28 {dimension_numbers = #tpu.dot_dimension_numbers<[1], [0], [0], [1], [0, 0, 1, 1], [], []>} : vector<16x32xf32>, vector<32x128xf32>, vector<16x128xf32> -> vector<16x128xf32>
    %66 = arith.addf %65, %32 : vector<16x128xf32>
    %cst_29 = arith.constant dense<0.000000e+00> : vector<16xf32>
    %67 = vector.multi_reduction <add>, %66, %cst_29 [1] : vector<16x128xf32> to vector<16xf32>
    %68 = vector.shape_cast %67 : vector<16xf32> to vector<16x1xf32>
    %cst_30 = arith.constant 1.280000e+02 : f32
    %69 = vector.broadcast %cst_30 : f32 to vector<16x1xf32>
    %70 = arith.divf %68, %69 : vector<16x1xf32>
    %71 = vector.broadcast %70 : vector<16x1xf32> to vector<16x128xf32>
    %72 = arith.subf %66, %71 : vector<16x128xf32>
    %73 = arith.mulf %72, %72 : vector<16x128xf32>
    %cst_31 = arith.constant dense<0.000000e+00> : vector<16xf32>
    %74 = vector.multi_reduction <add>, %73, %cst_31 [1] : vector<16x128xf32> to vector<16xf32>
    %75 = vector.shape_cast %74 : vector<16xf32> to vector<16x1xf32>
    %cst_32 = arith.constant 1.280000e+02 : f32
    %76 = vector.broadcast %cst_32 : f32 to vector<16x1xf32>
    %77 = arith.divf %75, %76 : vector<16x1xf32>
    %78 = vector.broadcast %70 : vector<16x1xf32> to vector<16x128xf32>
    %79 = arith.subf %66, %78 : vector<16x128xf32>
    %cst_33 = arith.constant 9.99999974E-6 : f32
    %80 = vector.broadcast %cst_33 : f32 to vector<16x1xf32>
    %81 = arith.addf %77, %80 : vector<16x1xf32>
    %82 = math.rsqrt %81 : vector<16x1xf32>
    %83 = vector.broadcast %82 : vector<16x1xf32> to vector<16x128xf32>
    %84 = arith.mulf %79, %83 : vector<16x128xf32>
    %85 = vector.extract_strided_slice %1 {offsets = [0, 0], sizes = [1, 128], strides = [1, 1]} : vector<2x128xf32> to vector<1x128xf32>
    %86 = vector.broadcast %85 : vector<1x128xf32> to vector<16x128xf32>
    %87 = arith.mulf %84, %86 : vector<16x128xf32>
    %88 = vector.extract_strided_slice %1 {offsets = [1, 0], sizes = [1, 128], strides = [1, 1]} : vector<2x128xf32> to vector<1x128xf32>
    %89 = vector.broadcast %88 : vector<1x128xf32> to vector<16x128xf32>
    %90 = arith.addf %87, %89 : vector<16x128xf32>
    %c0_34 = arith.constant 0 : index
    %c0_35 = arith.constant 0 : index
    %91 = vector.load %arg8[%c0_34, %c0_35] : memref<16x128xf32, #tpu.memory_space<vmem>>, vector<16x128xf32>
    tpu.vector_store %arg8[%c0_34, %c0_35], %90 {strides = array<i32>} : memref<16x128xf32, #tpu.memory_space<vmem>>, vector<16x128xf32>,
    return
  }
}

</mosaic_0001>

<llo_original>
// kernel: tpu_custom_call.1
$region0: #{tpu_custom_call.1}
  #allocation0 [shape = 'u32[]', space=smem, size = 0x4, offset = 0x4, fixed_abs, tag = 'smem constant byte address 0x4 - core index']
  #allocation1 [shape = 'u32[144,128]{1,0:T(1,128)}', space=vmem, size = 0x12000, scoped, tag = 'internal scratch']
  %s0 = inlined_call_operand.vmem [shape: f32[16,8], index: 0, kind: input, shape index: {}]
  %s1 = inlined_call_operand.vmem [shape: f32[16,1], index: 1, kind: input, shape index: {}]
  %s2 = inlined_call_operand.vmem [shape: f32[8,32], index: 2, kind: input, shape index: {}]
  %s3 = inlined_call_operand.vmem [shape: f32[32,128], index: 3, kind: input, shape index: {}]
  %s4 = inlined_call_operand.vmem [shape: f32[1,32], index: 4, kind: input, shape index: {}]
  %s5 = inlined_call_operand.hbm [shape: f32[32,128], index: 5, kind: input, shape index: {}]
  %s6 = inlined_call_operand.vmem [shape: f32[4,32], index: 6, kind: input, shape index: {}]
  %s7 = inlined_call_operand.vmem [shape: f32[2,128], index: 7, kind: input, shape index: {}]
  %s8 = inlined_call_operand.hbm [shape: f32[16,128], index: 8, kind: output, shape index: {}]
  %s9 = sld [smem:[#allocation0]]
  $region46: #{tpu_custom_call.1} parent=0
    _
  %s11 = ssub.s32 1, %s9
  %s12 = scalar_select 0, %s11, %s9
  $region1: #{tpu_custom_call.1} parent=0
    #allocation2 [shape = 'u8[16384]{0}', space=vmem, size = 0x4000, scoped, tag = 'input window, operand 5, single buffered']
    #allocation3 [shape = 's32[1]{0}', space=sflag, size = 0x4, scoped, tag = 'scoped memory for tpu_custom_call.1']
    #allocation4 [shape = 's32[1]{0}', space=sflag, size = 0x4, scoped, tag = 'scoped memory for tpu_custom_call.1']
    #allocation5 [shape = 'u8[8192]{0}', space=vmem, size = 0x2000, scoped, tag = 'output window, operand 0, single buffered']
    %13 = vsyncpa [#allocation3], 0
    %14 = vsyncpa [#allocation4], 0
    // Predicated region
    $region2: #{tpu_custom_call.1} parent=1 // pred_check
      _
    $region3: #{tpu_custom_call.1} parent=1 // pred_check_branch
      %16 = sbr.rel (0) target = $region5
    $region4: #{tpu_custom_call.1} parent=1 // pred_region
      _
    $region5: #{tpu_custom_call.1} parent=1 // pred_fallthru
      _
    // Predicated region
    $region6: #{tpu_custom_call.1} parent=1 // pred_check
      _
    $region7: #{tpu_custom_call.1} parent=1 // pred_check_branch
      %18 = sbr.rel (0) target = $region9
    $region8: #{tpu_custom_call.1} parent=1 // pred_region
      _
    $region9: #{tpu_custom_call.1} parent=1 // pred_fallthru
      _
    // Predicated region
    $region10: #{tpu_custom_call.1} parent=1 // pred_check
      _
    $region11: #{tpu_custom_call.1} parent=1 // pred_check_branch
      %20 = sbr.rel (0) target = $region13
    $region12: #{tpu_custom_call.1} parent=1 // pred_region
      _
    $region13: #{tpu_custom_call.1} parent=1 // pred_fallthru
      _
    // Predicated region
    $region14: #{tpu_custom_call.1} parent=1 // pred_check
      _
    $region15: #{tpu_custom_call.1} parent=1 // pred_check_branch
      %22 = sbr.rel (0) target = $region17
    $region16: #{tpu_custom_call.1} parent=1 // pred_region
      _
    $region17: #{tpu_custom_call.1} parent=1 // pred_fallthru
      _
    // Predicated region
    $region18: #{tpu_custom_call.1} parent=1 // pred_check
      _
    $region19: #{tpu_custom_call.1} parent=1 // pred_check_branch
      %24 = sbr.rel (0) target = $region21
    $region20: #{tpu_custom_call.1} parent=1 // pred_region
      _
    $region21: #{tpu_custom_call.1} parent=1 // pred_fallthru
      _
    // Predicated region
    $region22: #{tpu_custom_call.1} parent=1 // pred_check
      _
    $region23: #{tpu_custom_call.1} parent=1 // pred_check_branch
      %26 = sbr.rel (0) target = $region25
    $region24: #{tpu_custom_call.1} parent=1 // pred_region
      %s28 = ssub.s32 512, 512
      %29 = vsyncadd [#allocation3], %s28
      %s30 = sshll.u32 [#allocation2], 4
      %s31 = int_to_ptr.vmem [resolvable:$true] %s30
      %36 = dma.hbm_to_vmem [thread:$0]  %s5, 512, %s31, [#allocation3], 128, 128, 8
    $region25: #{tpu_custom_call.1} parent=1 // pred_fallthru
      _
    // Predicated region
    $region26: #{tpu_custom_call.1} parent=1 // pred_check
      _
    $region27: #{tpu_custom_call.1} parent=1 // pred_check_branch
      %38 = sbr.rel (0) target = $region29
    $region28: #{tpu_custom_call.1} parent=1 // pred_region
      _
    $region29: #{tpu_custom_call.1} parent=1 // pred_fallthru
      _
    // Predicated region
    $region30: #{tpu_custom_call.1} parent=1 // pred_check
      _
    $region31: #{tpu_custom_call.1} parent=1 // pred_check_branch
      %40 = sbr.rel (0) target = $region33
    $region32: #{tpu_custom_call.1} parent=1 // pred_region
      _
    $region33: #{tpu_custom_call.1} parent=1 // pred_fallthru
      _
    // Predicated region
    $region34: #{tpu_custom_call.1} parent=1 // pred_check
      _
    $region35: #{tpu_custom_call.1} parent=1 // pred_check_branch
      %42 = sbr.rel (0) target = $region37
    $region36: #{tpu_custom_call.1} parent=1 // pred_region
      %43 = dma.done [#allocation3], 512
    $region37: #{tpu_custom_call.1} parent=1 // pred_fallthru
      _
    %v44 = vld [vmem:[%s6] sm:$0xf]
    %v45 = vld [vmem:[%s7] sm:$0x3]
    %v46 = vld [vmem:[%s0] sm:$0xff]
    %v47 = vld [vmem:[%s0 + $0x8] sm:$0xff]
    %v48 = vld [vmem:[%s2] sm:$0xff]
    %vm49 = vcmask 64512
    %v51 = vsel %vm49, %v46, 0
    %v54 = vsel %vm49, %v47, 0
    %56 = vmatprep.subr.mxu0 0.0
    %57 = vmatpush1.msra.mxu0 %v48
    %58 = vmatprep.subr.mxu0 0.0
    %59 = vmatpush1.msra.mxu0 0.0
    %60 = vmatprep.subr.mxu0 0.0
    %61 = vmatpush1.msra.mxu0 0.0
    %62 = vmatprep.subr.mxu0 0.0
    %63 = vmatpush1.msra.mxu0 0.0
    %64 = vmatprep.subr.mxu0 0.0
    %65 = vmatpush1.msra.mxu0 0.0
    %66 = vmatprep.subr.mxu0 0.0
    %67 = vmatpush1.msra.mxu0 0.0
    %68 = vmatprep.subr.mxu0 0.0
    %69 = vmatpush1.msra.mxu0 0.0
    %70 = vmatprep.subr.mxu0 0.0
    %71 = vmatpush1.msra.mxu0 0.0
    %72 = vmatprep.subr.mxu0 0.0
    %73 = vmatpush1.msra.mxu0 0.0
    %74 = vmatprep.subr.mxu0 0.0
    %75 = vmatpush1.msra.mxu0 0.0
    %76 = vmatprep.subr.mxu0 0.0
    %77 = vmatpush1.msra.mxu0 0.0
    %78 = vmatprep.subr.mxu0 0.0
    %79 = vmatpush1.msra.mxu0 0.0
    %80 = vmatprep.subr.mxu0 0.0
    %81 = vmatpush1.msra.mxu0 0.0
    %82 = vmatprep.subr.mxu0 0.0
    %83 = vmatpush1.msra.mxu0 0.0
    %84 = vmatprep.subr.mxu0 0.0
    %85 = vmatpush1.msra.mxu0 0.0
    %86 = vmatprep.subr.mxu0 0.0
    %87 = vmatpush1.msra.mxu0 0.0
    %88 = vmatprep.subr.mxu0 0.0
    %89 = vmatpush1.msra.mxu0 0.0
    %90 = vmatprep.subr.mxu0 0.0
    %91 = vmatpush1.msra.mxu0 0.0
    %92 = vmatprep.subr.mxu0 0.0
    %93 = vmatpush1.msra.mxu0 0.0
    %94 = vmatprep.subr.mxu0 0.0
    %95 = vmatpush1.msra.mxu0 0.0
    %96 = vmatprep.subr.mxu0 0.0
    %97 = vmatpush1.msra.mxu0 0.0
    %98 = vmatprep.subr.mxu0 0.0
    %99 = vmatpush1.msra.mxu0 0.0
    %100 = vmatprep.subr.mxu0 0.0
    %101 = vmatpush1.msra.mxu0 0.0
    %102 = vmatprep.subr.mxu0 0.0
    %103 = vmatpush1.msra.mxu0 0.0
    %104 = vmatprep.subr.mxu0 0.0
    %105 = vmatpush1.msra.mxu0 0.0
    %106 = vmatprep.subr.mxu0 0.0
    %107 = vmatpush1.msra.mxu0 0.0
    %108 = vmatprep.subr.mxu0 0.0
    %109 = vmatpush1.msra.mxu0 0.0
    %110 = vmatprep.subr.mxu0 0.0
    %111 = vmatpush1.msra.mxu0 0.0
    %112 = vmatprep.subr.mxu0 0.0
    %113 = vmatpush1.msra.mxu0 0.0
    %114 = vmatprep.subr.mxu0 0.0
    %115 = vmatpush1.msra.mxu0 0.0
    %116 = vmatprep.subr.mxu0 0.0
    %117 = vmatpush1.msra.mxu0 0.0
    %118 = vmatprep.subr.mxu0 0.0
    %119 = vmatpush1.msra.mxu0 0.0
    %120 = vmatprep.mubr.f32.mxu0 0.0
    %121 = vmatmul.mubr.f32.gmra.mrb[0].mxu0 %v51
    %v122 = vpop.f32.mrb[0].mxu0
    %v123 = vadd.f32 0.0, %v122
    %v124 = vpop.f32.mrb[0].mxu0
    %125 = vmatprep.mubr.f32.mxu0 0.0
    %126 = vmatmul.mubr.f32.gmra.mrb[0].mxu0 %v54
    %v127 = vpop.f32.mrb[0].mxu0
    %v128 = vadd.f32 0.0, %v127
    %v129 = vpop.f32.mrb[0].mxu0
    %130 = vdwg.mxu0
    %v131 = vmax.f32 %v123, 0.0
    %v132 = vmax.f32 %v128, 0.0
    %vm133 = vcmask 261120
    %v134 = vsel %vm133, %v131, 0.0
    %135 = vadd.xlane.f32.xlu0 %v134
    %v136 = vpop.xlane.xlu0 %135
    %v137 = vsel %vm133, %v132, 0.0
    %138 = vadd.xlane.f32.xlu0 %v137
    %v139 = vpop.xlane.xlu0 %138
    %v140 = vrcp.pop 32.0
    %v141 = vmul.f32 %v136, %v140
    %v142 = vmul.f32 %v139, %v140
    %v143 = vsub.f32 %v131, %v141
    %v144 = vsub.f32 %v132, %v142
    %v145 = vmul.f32 %v143, %v143
    %v146 = vmul.f32 %v144, %v144
    %v147 = vsel %vm133, %v145, 0.0
    %148 = vadd.xlane.f32.xlu0 %v147
    %v149 = vpop.xlane.xlu0 %148
    %v150 = vsel %vm133, %v146, 0.0
    %151 = vadd.xlane.f32.xlu0 %v150
    %v152 = vpop.xlane.xlu0 %151
    %v153 = vmul.f32 %v149, %v140
    %v154 = vmul.f32 %v152, %v140
    %v155 = vadd.f32 %v153, 1e-05
    %v156 = vadd.f32 %v154, 1e-05
    %v157 = vrsqrt.pop %v155
    %v158 = vrsqrt.pop %v156
    %v159 = vmul.f32 %v143, %v157
    %v160 = vmul.f32 %v144, %v158
    %v161 = vlaneseq
    %v162 = vshrl.u32 %v161, 7
    %v163 = vsub.s32 0, %v162
    %v164 = vrot.slane %v44, %v163
    %v165 = vmul.f32 %v159, %v164
    %v166 = vmul.f32 %v160, %v164
    %v167 = vlaneseq
    %v168 = vshrl.u32 %v167, 7
    %v169 = vsub.s32 1, %v168
    %v170 = vrot.slane %v44, %v169
    %v171 = vadd.f32 %v165, %v170
    %v172 = vadd.f32 %v166, %v170
    %v173 = vld [vmem:[%s3] sm:$0xff]
    %v174 = vld [vmem:[%s3 + $0x8] sm:$0xff]
    %v175 = vld [vmem:[%s3 + $0x10] sm:$0xff]
    %v176 = vld [vmem:[%s3 + $0x18] sm:$0xff]
    %v178 = vsel %vm133, %v171, 0
    %v181 = vsel %vm133, %v172, 0
    %183 = vmatprep.subr.mxu0 0.0
    %184 = vmatpush1.msra.mxu0 %v173
    %185 = vmatprep.subr.mxu0 0.0
    %186 = vmatpush1.msra.mxu0 %v174
    %187 = vmatprep.subr.mxu0 0.0
    %188 = vmatpush1.msra.mxu0 %v175
    %189 = vmatprep.subr.mxu0 0.0
    %190 = vmatpush1.msra.mxu0 %v176
    %191 = vmatprep.subr.mxu0 0.0
    %192 = vmatpush1.msra.mxu0 0.0
    %193 = vmatprep.subr.mxu0 0.0
    %194 = vmatpush1.msra.mxu0 0.0
    %195 = vmatprep.subr.mxu0 0.0
    %196 = vmatpush1.msra.mxu0 0.0
    %197 = vmatprep.subr.mxu0 0.0
    %198 = vmatpush1.msra.mxu0 0.0
    %199 = vmatprep.subr.mxu0 0.0
    %200 = vmatpush1.msra.mxu0 0.0
    %201 = vmatprep.subr.mxu0 0.0
    %202 = vmatpush1.msra.mxu0 0.0
    %203 = vmatprep.subr.mxu0 0.0
    %204 = vmatpush1.msra.mxu0 0.0
    %205 = vmatprep.subr.mxu0 0.0
    %206 = vmatpush1.msra.mxu0 0.0
    %207 = vmatprep.subr.mxu0 0.0
    %208 = vmatpush1.msra.mxu0 0.0
    %209 = vmatprep.subr.mxu0 0.0
    %210 = vmatpush1.msra.mxu0 0.0
    %211 = vmatprep.subr.mxu0 0.0
    %212 = vmatpush1.msra.mxu0 0.0
    %213 = vmatprep.subr.mxu0 0.0
    %214 = vmatpush1.msra.mxu0 0.0
    %215 = vmatprep.subr.mxu0 0.0
    %216 = vmatpush1.msra.mxu0 0.0
    %217 = vmatprep.subr.mxu0 0.0
    %218 = vmatpush1.msra.mxu0 0.0
    %219 = vmatprep.subr.mxu0 0.0
    %220 = vmatpush1.msra.mxu0 0.0
    %221 = vmatprep.subr.mxu0 0.0
    %222 = vmatpush1.msra.mxu0 0.0
    %223 = vmatprep.subr.mxu0 0.0
    %224 = vmatpush1.msra.mxu0 0.0
    %225 = vmatprep.subr.mxu0 0.0
    %226 = vmatpush1.msra.mxu0 0.0
    %227 = vmatprep.subr.mxu0 0.0
    %228 = vmatpush1.msra.mxu0 0.0
    %229 = vmatprep.subr.mxu0 0.0
    %230 = vmatpush1.msra.mxu0 0.0
    %231 = vmatprep.subr.mxu0 0.0
    %232 = vmatpush1.msra.mxu0 0.0
    %233 = vmatprep.subr.mxu0 0.0
    %234 = vmatpush1.msra.mxu0 0.0
    %235 = vmatprep.subr.mxu0 0.0
    %236 = vmatpush1.msra.mxu0 0.0
    %237 = vmatprep.subr.mxu0 0.0
    %238 = vmatpush1.msra.mxu0 0.0
    %239 = vmatprep.subr.mxu0 0.0
    %240 = vmatpush1.msra.mxu0 0.0
    %241 = vmatprep.subr.mxu0 0.0
    %242 = vmatpush1.msra.mxu0 0.0
    %243 = vmatprep.subr.mxu0 0.0
    %244 = vmatpush1.msra.mxu0 0.0
    %245 = vmatprep.subr.mxu0 0.0
    %246 = vmatpush1.msra.mxu0 0.0
    %247 = vmatprep.mubr.f32.mxu0 0.0
    %248 = vmatmul.mubr.f32.gmra.mrb[0].mxu0 %v178
    %v249 = vpop.f32.mrb[0].mxu0
    %v250 = vadd.f32 0.0, %v249
    %v251 = vpop.f32.mrb[0].mxu0
    %252 = vmatprep.mubr.f32.mxu0 0.0
    %253 = vmatmul.mubr.f32.gmra.mrb[0].mxu0 %v181
    %v254 = vpop.f32.mrb[0].mxu0
    %v255 = vadd.f32 0.0, %v254
    %v256 = vpop.f32.mrb[0].mxu0
    %257 = vdwg.mxu0
    %v258 = vld [vmem:[%s1] sm:$0xff]
    %v259 = vld [vmem:[%s1 + $0x8] sm:$0xff]
    %v260 = vld [vmem:[%s4] sm:$0x1]
    %262 = vset.pattern.permute.xlu0 0
    %263 = vperm.xlu0 %262, %v258
    %v264 = vpop.permute.xlu0 %263
    %267 = vset.pattern.permute.xlu0 0
    %268 = vperm.xlu0 %267, %v259
    %v269 = vpop.permute.xlu0 %268
    %v272 = vlaneseq
    %v273 = vshrl.u32 %v272, 7
    %v274 = vsub.s32 0, %v273
    %v275 = vrot.slane %v260, %v274
    %v277 = vmul.f32 %v264, %v275
    %v278 = vmul.f32 %v269, %v275
    %v279 = vmax.f32 %v277, 0.0
    %v280 = vmax.f32 %v278, 0.0
    %v281 = vsel %vm133, %v279, 0.0
    %282 = vadd.xlane.f32.xlu0 %v281
    %v283 = vpop.xlane.xlu0 %282
    %v284 = vsel %vm133, %v280, 0.0
    %285 = vadd.xlane.f32.xlu0 %v284
    %v286 = vpop.xlane.xlu0 %285
    %v287 = vmul.f32 %v283, %v140
    %v288 = vmul.f32 %v286, %v140
    %v289 = vsub.f32 %v279, %v287
    %v290 = vsub.f32 %v280, %v288
    %v291 = vmul.f32 %v289, %v289
    %v292 = vmul.f32 %v290, %v290
    %v293 = vsel %vm133, %v291, 0.0
    %294 = vadd.xlane.f32.xlu0 %v293
    %v295 = vpop.xlane.xlu0 %294
    %v296 = vsel %vm133, %v292, 0.0
    %297 = vadd.xlane.f32.xlu0 %v296
    %v298 = vpop.xlane.xlu0 %297
    %v299 = vmul.f32 %v295, %v140
    %v300 = vmul.f32 %v298, %v140
    %v301 = vadd.f32 %v299, 1e-05
    %v302 = vadd.f32 %v300, 1e-05
    %v303 = vrsqrt.pop %v301
    %v304 = vrsqrt.pop %v302
    %v305 = vmul.f32 %v289, %v303
    %v306 = vmul.f32 %v290, %v304
    %v307 = vlaneseq
    %v308 = vshrl.u32 %v307, 7
    %v309 = vsub.s32 2, %v308
    %v310 = vrot.slane %v44, %v309
    %v311 = vmul.f32 %v305, %v310
    %v312 = vmul.f32 %v306, %v310
    %v313 = vlaneseq
    %v314 = vshrl.u32 %v313, 7
    %v315 = vsub.s32 3, %v314
    %v316 = vrot.slane %v44, %v315
    %v317 = vadd.f32 %v311, %v316
    %v318 = vadd.f32 %v312, %v316
    %v319 = vld [vmem:[#allocation2] sm:$0xff]
    %v320 = vld [vmem:[#allocation2 + $0x8] sm:$0xff]
    %v321 = vld [vmem:[#allocation2 + $0x10] sm:$0xff]
    %v322 = vld [vmem:[#allocation2 + $0x18] sm:$0xff]
    %v324 = vsel %vm133, %v317, 0
    %v327 = vsel %vm133, %v318, 0
    %329 = vmatprep.subr.mxu0 0.0
    %330 = vmatpush1.msra.mxu0 %v319
    %331 = vmatprep.subr.mxu0 0.0
    %332 = vmatpush1.msra.mxu0 %v320
    %333 = vmatprep.subr.mxu0 0.0
    %334 = vmatpush1.msra.mxu0 %v321
    %335 = vmatprep.subr.mxu0 0.0
    %336 = vmatpush1.msra.mxu0 %v322
    %337 = vmatprep.subr.mxu0 0.0
    %338 = vmatpush1.msra.mxu0 0.0
    %339 = vmatprep.subr.mxu0 0.0
    %340 = vmatpush1.msra.mxu0 0.0
    %341 = vmatprep.subr.mxu0 0.0
    %342 = vmatpush1.msra.mxu0 0.0
    %343 = vmatprep.subr.mxu0 0.0
    %344 = vmatpush1.msra.mxu0 0.0
    %345 = vmatprep.subr.mxu0 0.0
    %346 = vmatpush1.msra.mxu0 0.0
    %347 = vmatprep.subr.mxu0 0.0
    %348 = vmatpush1.msra.mxu0 0.0
    %349 = vmatprep.subr.mxu0 0.0
    %350 = vmatpush1.msra.mxu0 0.0
    %351 = vmatprep.subr.mxu0 0.0
    %352 = vmatpush1.msra.mxu0 0.0
    %353 = vmatprep.subr.mxu0 0.0
    %354 = vmatpush1.msra.mxu0 0.0
    %355 = vmatprep.subr.mxu0 0.0
    %356 = vmatpush1.msra.mxu0 0.0
    %357 = vmatprep.subr.mxu0 0.0
    %358 = vmatpush1.msra.mxu0 0.0
    %359 = vmatprep.subr.mxu0 0.0
    %360 = vmatpush1.msra.mxu0 0.0
    %361 = vmatprep.subr.mxu0 0.0
    %362 = vmatpush1.msra.mxu0 0.0
    %363 = vmatprep.subr.mxu0 0.0
    %364 = vmatpush1.msra.mxu0 0.0
    %365 = vmatprep.subr.mxu0 0.0
    %366 = vmatpush1.msra.mxu0 0.0
    %367 = vmatprep.subr.mxu0 0.0
    %368 = vmatpush1.msra.mxu0 0.0
    %369 = vmatprep.subr.mxu0 0.0
    %370 = vmatpush1.msra.mxu0 0.0
    %371 = vmatprep.subr.mxu0 0.0
    %372 = vmatpush1.msra.mxu0 0.0
    %373 = vmatprep.subr.mxu0 0.0
    %374 = vmatpush1.msra.mxu0 0.0
    %375 = vmatprep.subr.mxu0 0.0
    %376 = vmatpush1.msra.mxu0 0.0
    %377 = vmatprep.subr.mxu0 0.0
    %378 = vmatpush1.msra.mxu0 0.0
    %379 = vmatprep.subr.mxu0 0.0
    %380 = vmatpush1.msra.mxu0 0.0
    %381 = vmatprep.subr.mxu0 0.0
    %382 = vmatpush1.msra.mxu0 0.0
    %383 = vmatprep.subr.mxu0 0.0
    %384 = vmatpush1.msra.mxu0 0.0
    %385 = vmatprep.subr.mxu0 0.0
    %386 = vmatpush1.msra.mxu0 0.0
    %387 = vmatprep.subr.mxu0 0.0
    %388 = vmatpush1.msra.mxu0 0.0
    %389 = vmatprep.subr.mxu0 0.0
    %390 = vmatpush1.msra.mxu0 0.0
    %391 = vmatprep.subr.mxu0 0.0
    %392 = vmatpush1.msra.mxu0 0.0
    %393 = vmatprep.mubr.f32.mxu0 0.0
    %394 = vmatmul.mubr.f32.gmra.mrb[0].mxu0 %v324
    %v395 = vpop.f32.mrb[0].mxu0
    %v396 = vadd.f32 %v250, %v395
    %v397 = vpop.f32.mrb[0].mxu0
    %398 = vmatprep.mubr.f32.mxu0 0.0
    %399 = vmatmul.mubr.f32.gmra.mrb[0].mxu0 %v327
    %v400 = vpop.f32.mrb[0].mxu0
    %v401 = vadd.f32 %v255, %v400
    %v402 = vpop.f32.mrb[0].mxu0
    %403 = vdwg.mxu0
    %404 = vadd.xlane.f32.xlu0 %v396
    %v405 = vpop.xlane.xlu0 %404
    %406 = vadd.xlane.f32.xlu0 %v401
    %v407 = vpop.xlane.xlu0 %406
    %v408 = vrcp.pop 128.0
    %v409 = vmul.f32 %v405, %v408
    %v410 = vmul.f32 %v407, %v408
    %v411 = vsub.f32 %v396, %v409
    %v412 = vsub.f32 %v401, %v410
    %v413 = vmul.f32 %v411, %v411
    %v414 = vmul.f32 %v412, %v412
    %415 = vadd.xlane.f32.xlu0 %v413
    %v416 = vpop.xlane.xlu0 %415
    %417 = vadd.xlane.f32.xlu0 %v414
    %v418 = vpop.xlane.xlu0 %417
    %v419 = vmul.f32 %v416, %v408
    %v420 = vmul.f32 %v418, %v408
    %v421 = vadd.f32 %v419, 1e-05
    %v422 = vadd.f32 %v420, 1e-05
    %v423 = vrsqrt.pop %v421
    %v424 = vrsqrt.pop %v422
    %v425 = vmul.f32 %v411, %v423
    %v426 = vmul.f32 %v412, %v424
    %v427 = vlaneseq
    %v428 = vshrl.u32 %v427, 7
    %v429 = vsub.s32 0, %v428
    %v430 = vrot.slane %v45, %v429
    %v431 = vmul.f32 %v425, %v430
    %v432 = vmul.f32 %v426, %v430
    %v433 = vlaneseq
    %v434 = vshrl.u32 %v433, 7
    %v435 = vsub.s32 1, %v434
    %v436 = vrot.slane %v45, %v435
    %v437 = vadd.f32 %v431, %v436
    %v438 = vadd.f32 %v432, %v436
    %439 = vst [vmem:[#allocation5] sm:$0xff] %v437
    %440 = vst [vmem:[#allocation5 + $0x8] sm:$0xff] %v438
    // Predicated region
    $region38: #{tpu_custom_call.1} parent=1 // pred_check
      _
    $region39: #{tpu_custom_call.1} parent=1 // pred_check_branch
      %442 = sbr.rel (0) target = $region41
    $region40: #{tpu_custom_call.1} parent=1 // pred_region
      %s444 = ssub.s32 256, 256
      %445 = vsyncadd [#allocation4], %s444
      %s446 = sshll.u32 [#allocation5], 4
      %s447 = int_to_ptr.vmem [resolvable:$true] %s446
      %452 = dma.vmem_to_hbm [thread:$0]  %s447, 256, %s8, [#allocation4], 128, 128, 8
    $region41: #{tpu_custom_call.1} parent=1 // pred_fallthru
      _
    // Predicated region
    $region42: #{tpu_custom_call.1} parent=1 // pred_check
      _
    $region43: #{tpu_custom_call.1} parent=1 // pred_check_branch
      %454 = sbr.rel (0) target = $region45
    $region44: #{tpu_custom_call.1} parent=1 // pred_region
      %455 = dma.done [#allocation4], 256
    $region45: #{tpu_custom_call.1} parent=1 // pred_fallthru
      _
    %456 = vsyncpa [#allocation3], 1
    %457 = vsyncpa [#allocation4], 1

</llo_original>
